<compile_context>
chip_gen: v7x
topology: tpu7x:2x2x1
jax: 0.10.0
libtpu: 0.0.40
codegen_flags: <defaults>
</compile_context>

<pallas_src>
import jax
import jax.numpy as jnp
from jax.experimental import pallas as pl
from jax.experimental.pallas import tpu as pltpu


def add_attention_kernel(x_ref, y_ref, w1_ref, b1_ref, w2_ref, b2_ref, o_ref):
    # x_ref / y_ref / o_ref: (TB, C, HW) block  (HW on lanes, C on sublanes)
    x = x_ref[...]
    y = y_ref[...]
    tb = x.shape[0]
    hw = x.shape[-1]

    # Adaptive avg / max pool over spatial -> (TB, C) each (XLU lane-reduce).
    inv_hw = jnp.float32(1.0 / hw)
    avg_pool = jnp.sum(x, axis=-1) * inv_hw
    max_pool = jnp.max(x, axis=-1)

    # Fuse the two shared-MLP passes (and all TB samples) into one stacked pass.
    pooled = jnp.concatenate([avg_pool, max_pool], axis=0)      # (2*TB, C)

    w1 = w1_ref[...]          # (C, mid)
    b1 = b1_ref[...]          # (1, mid)
    w2 = w2_ref[...]          # (mid, C)
    b2 = b2_ref[...]          # (1, C)
    mid = w1.shape[1]

    # First linear + ReLU: stacked rows fill MXU sublanes.
    h = jnp.dot(pooled, w1, preferred_element_type=jnp.float32) + b1   # (2*TB, mid)
    h = jnp.maximum(h, 0.0)

    # Second linear: K = mid is tiny, so skip the MXU and use VPU FMAs.
    if mid <= 8:
        acc = h[:, 0:1] * w2[0:1, :]
        for k in range(1, mid):
            acc = acc + h[:, k:k + 1] * w2[k:k + 1, :]
    else:
        acc = jnp.dot(h, w2, preferred_element_type=jnp.float32)
    acc = acc + b2                                                      # (2*TB, C)

    # mlp(avg) + mlp(max): each half already carries +b2, so summing halves
    # matches the reference exactly (both passes add b2 before the sum).
    att = jax.nn.sigmoid(acc[:tb] + acc[tb:])                           # (TB, C)

    # Single small relayout per grid step to broadcast over HW lanes.
    att_b = att[:, :, None]                                             # (TB, C, 1)

    # att*x + (1-att)*y  ==  y + att*(x - y): 3 full-tile VPU ops.
    o_ref[...] = y + att_b * (x - y)


def add_forward(x, y, w1, b1, w2, b2, *, tb=None):
    """x, y: (B, C, H, W) float32.  Returns (B, C, H, W)."""
    B, C, H, W = x.shape
    HW = H * W
    mid = w1.shape[1]

    if tb is None:
        # ~4 MiB per x/y/out block: 3 tensors x 2 pipeline buffers ~= 24 MiB,
        # inside the explicit 32 MiB scoped-VMEM limit on every generation.
        bytes_per_sample = C * HW * 4
        tb = max(1, min(B, (4 << 20) // max(1, bytes_per_sample)))
    while B % tb:          # keep the grid exact (no partial batch tiles)
        tb -= 1

    x2 = x.reshape(B, C, HW)
    y2 = y.reshape(B, C, HW)
    b1r = b1.reshape(1, -1)
    b2r = b2.reshape(1, -1)

    out = pl.pallas_call(
        add_attention_kernel,
        out_shape=jax.ShapeDtypeStruct((B, C, HW), jnp.float32),
        grid_spec=pltpu.PrefetchScalarGridSpec(
            num_scalar_prefetch=0,
            grid=(B // tb,),
            in_specs=[
                pl.BlockSpec((tb, C, HW), lambda b: (b, 0, 0)),
                pl.BlockSpec((tb, C, HW), lambda b: (b, 0, 0)),
                pl.BlockSpec((C, mid), lambda b: (0, 0)),
                pl.BlockSpec((1, mid), lambda b: (0, 0)),
                pl.BlockSpec((mid, C), lambda b: (0, 0)),
                pl.BlockSpec((1, C), lambda b: (0, 0)),
            ],
            out_specs=pl.BlockSpec((tb, C, HW), lambda b: (b, 0, 0)),
        ),
        compiler_params=pltpu.CompilerParams(
            dimension_semantics=("parallel",),
            vmem_limit_bytes=32 << 20,
        ),
    )(x2, y2, w1, b1r, w2, b2r)
    return out.reshape(B, C, H, W)


def reference(x, y, w1, b1, w2, b2):
    avg = jnp.mean(x, axis=(2, 3))
    mx = jnp.max(x, axis=(2, 3))

    def mlp(p):
        h = jnp.maximum(p @ w1 + b1, 0.0)
        return h @ w2 + b2

    att = jax.nn.sigmoid(mlp(avg) + mlp(mx))[:, :, None, None]
    return att * x + (1.0 - att) * y


if __name__ == "__main__":
    B, C, H, W = 2, 32, 16, 16       # c1 = 32, reduction = 16 -> mid = 2
    mid = C // 16

    key = jax.random.PRNGKey(0)
    kx, ky, kw1, kb1, kw2, kb2 = jax.random.split(key, 6)
    x = jax.random.normal(kx, (B, C, H, W), dtype=jnp.float32)
    y = jax.random.normal(ky, (B, C, H, W), dtype=jnp.float32)

    # Deterministic parameter init (Linear weights stored in (in, out) layout)
    w1 = jax.random.normal(kw1, (C, mid), dtype=jnp.float32) * 0.1
    b1 = jax.random.normal(kb1, (mid,), dtype=jnp.float32) * 0.1
    w2 = jax.random.normal(kw2, (mid, C), dtype=jnp.float32) * 0.1
    b2 = jax.random.normal(kb2, (C,), dtype=jnp.float32) * 0.1

    out = add_forward(x, y, w1, b1, w2, b2)
    jax.block_until_ready(out)

    ref = reference(x, y, w1, b1, w2, b2)
    assert jnp.allclose(out, ref, atol=1e-5, rtol=1e-5), "mismatch vs reference"
    print("KERNEL_OK")
</pallas_src>

<mosaic_0001>
module attributes {stable_mosaic.version = 11 : i64} {
  func.func @add_attention_kernel(%arg0: i32, %arg1: memref<2x32x256xf32, #tpu.memory_space<vmem>>, %arg2: memref<2x32x256xf32, #tpu.memory_space<vmem>>, %arg3: memref<32x2xf32, #tpu.memory_space<vmem>>, %arg4: memref<1x2xf32, #tpu.memory_space<vmem>>, %arg5: memref<2x32xf32, #tpu.memory_space<vmem>>, %arg6: memref<1x32xf32, #tpu.memory_space<vmem>>, %arg7: memref<2x32x256xf32, #tpu.memory_space<vmem>>) attributes {dimension_semantics = [#tpu.dimension_semantics<parallel>], iteration_bounds = array<i64: 1>, scalar_prefetch = 0 : i64, scratch_operands = 0 : i64, tpu.core_type = #tpu.core_type<tc>, window_params = [{transform_indices = @transform_0, window_bounds = array<i64: 2, 32, 256>}, {transform_indices = @transform_1, window_bounds = array<i64: 2, 32, 256>}, {pipeline_mode = #tpu.pipeline_mode<synchronous>, transform_indices = @transform_2, window_bounds = array<i64: 32, 2>}, {pipeline_mode = #tpu.pipeline_mode<synchronous>, transform_indices = @transform_3, window_bounds = array<i64: 1, 2>}, {pipeline_mode = #tpu.pipeline_mode<synchronous>, transform_indices = @transform_4, window_bounds = array<i64: 2, 32>}, {pipeline_mode = #tpu.pipeline_mode<synchronous>, transform_indices = @transform_5, window_bounds = array<i64: 1, 32>}, {transform_indices = @transform_6, window_bounds = array<i64: 2, 32, 256>}]} {
    %c0 = arith.constant 0 : index
    %c0_0 = arith.constant 0 : index
    %c0_1 = arith.constant 0 : index
    %0 = vector.load %arg1[%c0, %c0_0, %c0_1] : memref<2x32x256xf32, #tpu.memory_space<vmem>>, vector<2x32x256xf32>
    %c0_2 = arith.constant 0 : index
    %c0_3 = arith.constant 0 : index
    %c0_4 = arith.constant 0 : index
    %1 = vector.load %arg2[%c0_2, %c0_3, %c0_4] : memref<2x32x256xf32, #tpu.memory_space<vmem>>, vector<2x32x256xf32>
    %cst = arith.constant dense<0.000000e+00> : vector<2x32xf32>
    %2 = vector.multi_reduction <add>, %0, %cst [2] : vector<2x32x256xf32> to vector<2x32xf32>
    %cst_5 = arith.constant 3.906250e-03 : f32
    %3 = vector.broadcast %cst_5 : f32 to vector<2x32xf32>
    %4 = arith.mulf %2, %3 : vector<2x32xf32>
    %cst_6 = arith.constant dense<0xFF800000> : vector<2x32xf32>
    %5 = vector.multi_reduction <maximumf>, %0, %cst_6 [2] : vector<2x32x256xf32> to vector<2x32xf32>
    %6 = tpu.concatenate %4, %5 in 0 : vector<2x32xf32>, vector<2x32xf32> -> vector<4x32xf32>
    %c0_7 = arith.constant 0 : index
    %c0_8 = arith.constant 0 : index
    %7 = vector.load %arg3[%c0_7, %c0_8] : memref<32x2xf32, #tpu.memory_space<vmem>>, vector<32x2xf32>
    %c0_9 = arith.constant 0 : index
    %c0_10 = arith.constant 0 : index
    %8 = vector.load %arg4[%c0_9, %c0_10] : memref<1x2xf32, #tpu.memory_space<vmem>>, vector<1x2xf32>
    %c0_11 = arith.constant 0 : index
    %c0_12 = arith.constant 0 : index
    %9 = vector.load %arg5[%c0_11, %c0_12] : memref<2x32xf32, #tpu.memory_space<vmem>>, vector<2x32xf32>
    %c0_13 = arith.constant 0 : index
    %c0_14 = arith.constant 0 : index
    %10 = vector.load %arg6[%c0_13, %c0_14] : memref<1x32xf32, #tpu.memory_space<vmem>>, vector<1x32xf32>
    %cst_15 = arith.constant dense<0.000000e+00> : vector<4x2xf32>
    %11 = tpu.matmul %6, %7, %cst_15 {dimension_numbers = #tpu.dot_dimension_numbers<[1], [0], [0], [1], [0, 0, 1, 1], [], []>} : vector<4x32xf32>, vector<32x2xf32>, vector<4x2xf32> -> vector<4x2xf32>
    %12 = vector.broadcast %8 : vector<1x2xf32> to vector<4x2xf32>
    %13 = arith.addf %11, %12 : vector<4x2xf32>
    %cst_16 = arith.constant 0.000000e+00 : f32
    %14 = vector.broadcast %cst_16 : f32 to vector<4x2xf32>
    %15 = arith.maximumf %13, %14 : vector<4x2xf32>
    %16 = vector.extract_strided_slice %15 {offsets = [0, 0], sizes = [4, 1], strides = [1, 1]} : vector<4x2xf32> to vector<4x1xf32>
    %17 = vector.extract_strided_slice %9 {offsets = [0, 0], sizes = [1, 32], strides = [1, 1]} : vector<2x32xf32> to vector<1x32xf32>
    %18 = vector.broadcast %16 : vector<4x1xf32> to vector<4x32xf32>
    %19 = vector.broadcast %17 : vector<1x32xf32> to vector<4x32xf32>
    %20 = arith.mulf %18, %19 : vector<4x32xf32>
    %21 = vector.extract_strided_slice %15 {offsets = [0, 1], sizes = [4, 1], strides = [1, 1]} : vector<4x2xf32> to vector<4x1xf32>
    %22 = vector.extract_strided_slice %9 {offsets = [1, 0], sizes = [1, 32], strides = [1, 1]} : vector<2x32xf32> to vector<1x32xf32>
    %23 = vector.broadcast %21 : vector<4x1xf32> to vector<4x32xf32>
    %24 = vector.broadcast %22 : vector<1x32xf32> to vector<4x32xf32>
    %25 = arith.mulf %23, %24 : vector<4x32xf32>
    %26 = arith.addf %20, %25 : vector<4x32xf32>
    %27 = vector.broadcast %10 : vector<1x32xf32> to vector<4x32xf32>
    %28 = arith.addf %26, %27 : vector<4x32xf32>
    %29 = vector.extract_strided_slice %28 {offsets = [0, 0], sizes = [2, 32], strides = [1, 1]} : vector<4x32xf32> to vector<2x32xf32>
    %30 = vector.extract_strided_slice %28 {offsets = [2, 0], sizes = [2, 32], strides = [1, 1]} : vector<4x32xf32> to vector<2x32xf32>
    %31 = arith.addf %29, %30 : vector<2x32xf32>
    %32 = arith.negf %31 : vector<2x32xf32>
    %33 = math.exp %32 : vector<2x32xf32>
    %cst_17 = arith.constant 1.000000e+00 : f32
    %34 = vector.broadcast %cst_17 : f32 to vector<2x32xf32>
    %35 = arith.addf %34, %33 : vector<2x32xf32>
    %36 = arith.divf %34, %35 : vector<2x32xf32>
    %37 = vector.shape_cast %36 : vector<2x32xf32> to vector<2x32x1xf32>
    %38 = arith.subf %0, %1 : vector<2x32x256xf32>
    %39 = vector.broadcast %37 : vector<2x32x1xf32> to vector<2x32x256xf32>
    %40 = arith.mulf %39, %38 : vector<2x32x256xf32>
    %41 = arith.addf %1, %40 : vector<2x32x256xf32>
    %c0_18 = arith.constant 0 : index
    %c0_19 = arith.constant 0 : index
    %c0_20 = arith.constant 0 : index
    %42 = vector.load %arg7[%c0_18, %c0_19, %c0_20] : memref<2x32x256xf32, #tpu.memory_space<vmem>>, vector<2x32x256xf32>
    tpu.vector_store %arg7[%c0_18, %c0_19, %c0_20], %41 {strides = array<i32>} : memref<2x32x256xf32, #tpu.memory_space<vmem>>, vector<2x32x256xf32>,
    return
  }
  func.func @transform_0(%arg0: i32) -> (i32, i32, i32) {
    %c0_i32 = arith.constant 0 : i32
    %c0_i32_0 = arith.constant 0 : i32
    %c0_i32_1 = arith.constant 0 : i32
    return %arg0, %c0_i32, %c0_i32_0 : i32, i32, i32
  }
  func.func @transform_1(%arg0: i32) -> (i32, i32, i32) {
    %c0_i32 = arith.constant 0 : i32
    %c0_i32_0 = arith.constant 0 : i32
    %c0_i32_1 = arith.constant 0 : i32
    return %arg0, %c0_i32, %c0_i32_0 : i32, i32, i32
  }
  func.func @transform_2(%arg0: i32) -> (i32, i32) {
    %c0_i32 = arith.constant 0 : i32
    %c0_i32_0 = arith.constant 0 : i32
    %c0_i32_1 = arith.constant 0 : i32
    return %c0_i32, %c0_i32_0 : i32, i32
  }
  func.func @transform_3(%arg0: i32) -> (i32, i32) {
    %c0_i32 = arith.constant 0 : i32
    %c0_i32_0 = arith.constant 0 : i32
    %c0_i32_1 = arith.constant 0 : i32
    return %c0_i32, %c0_i32_0 : i32, i32
  }
  func.func @transform_4(%arg0: i32) -> (i32, i32) {
    %c0_i32 = arith.constant 0 : i32
    %c0_i32_0 = arith.constant 0 : i32
    %c0_i32_1 = arith.constant 0 : i32
    return %c0_i32, %c0_i32_0 : i32, i32
  }
  func.func @transform_5(%arg0: i32) -> (i32, i32) {
    %c0_i32 = arith.constant 0 : i32
    %c0_i32_0 = arith.constant 0 : i32
    %c0_i32_1 = arith.constant 0 : i32
    return %c0_i32, %c0_i32_0 : i32, i32
  }
  func.func @transform_6(%arg0: i32) -> (i32, i32, i32) {
    %c0_i32 = arith.constant 0 : i32
    %c0_i32_0 = arith.constant 0 : i32
    %c0_i32_1 = arith.constant 0 : i32
    return %arg0, %c0_i32, %c0_i32_0 : i32, i32, i32
  }
}

</mosaic_0001>

<llo_original>
// kernel: tpu_custom_call.1
$region0: #{tpu_custom_call.1}
  #allocation0 [shape = 'u32[]', space=smem, size = 0x4, offset = 0x4, fixed_abs, tag = 'smem constant byte address 0x4 - core index']
  #allocation1 [shape = 'u32[144,128]{1,0:T(1,128)}', space=vmem, size = 0x12000, scoped, tag = 'internal scratch']
  %s0 = inlined_call_operand.hbm [shape: f32[2,32,256], index: 0, kind: input, shape index: {}]
  %s1 = inlined_call_operand.hbm [shape: f32[2,32,256], index: 1, kind: input, shape index: {}]
  %s2 = inlined_call_operand.vmem [shape: f32[32,2], index: 2, kind: input, shape index: {}]
  %s3 = inlined_call_operand.vmem [shape: f32[1,2], index: 3, kind: input, shape index: {}]
  %s4 = inlined_call_operand.vmem [shape: f32[2,32], index: 4, kind: input, shape index: {}]
  %s5 = inlined_call_operand.vmem [shape: f32[1,32], index: 5, kind: input, shape index: {}]
  %s6 = inlined_call_operand.hbm [shape: f32[2,32,256], index: 6, kind: output, shape index: {}]
  %s7 = sld [smem:[#allocation0]]
  $region42: #{tpu_custom_call.1} parent=0
    _
  %s9 = ssub.s32 1, %s7
  %s10 = scalar_select 0, %s9, %s7
  $region1: #{tpu_custom_call.1} parent=0
    #allocation2 [shape = 'u8[65536]{0}', space=vmem, size = 0x10000, scoped, tag = 'input window, operand 0, single buffered']
    #allocation3 [shape = 's32[1]{0}', space=sflag, size = 0x4, scoped, tag = 'scoped memory for tpu_custom_call.1']
    #allocation4 [shape = 's32[1]{0}', space=sflag, size = 0x4, scoped, tag = 'scoped memory for tpu_custom_call.1']
    #allocation5 [shape = 'u8[65536]{0}', space=vmem, size = 0x10000, scoped, tag = 'input window, operand 1, single buffered']
    #allocation6 [shape = 's32[1]{0}', space=sflag, size = 0x4, scoped, tag = 'scoped memory for tpu_custom_call.1']
    #allocation7 [shape = 'u8[65536]{0}', space=vmem, size = 0x10000, scoped, tag = 'output window, operand 0, single buffered']
    %11 = vsyncpa [#allocation3], 0
    %12 = vsyncpa [#allocation6], 0
    %13 = vsyncpa [#allocation4], 0
    // Predicated region
    $region2: #{tpu_custom_call.1} parent=1 // pred_check
      _
    $region3: #{tpu_custom_call.1} parent=1 // pred_check_branch
      %15 = sbr.rel (0) target = $region5
    $region4: #{tpu_custom_call.1} parent=1 // pred_region
      %s17 = ssub.s32 2048, 2048
      %18 = vsyncadd [#allocation3], %s17
      %s19 = sshll.u32 [#allocation2], 4
      %s20 = int_to_ptr.vmem [resolvable:$true] %s19
      %25 = dma.hbm_to_vmem [thread:$0]  %s0, 2048, %s20, [#allocation3], 256, 256, 16
    $region5: #{tpu_custom_call.1} parent=1 // pred_fallthru
      _
    // Predicated region
    $region6: #{tpu_custom_call.1} parent=1 // pred_check
      _
    $region7: #{tpu_custom_call.1} parent=1 // pred_check_branch
      %27 = sbr.rel (0) target = $region9
    $region8: #{tpu_custom_call.1} parent=1 // pred_region
      %s29 = ssub.s32 2048, 2048
      %30 = vsyncadd [#allocation6], %s29
      %s31 = sshll.u32 [#allocation5], 4
      %s32 = int_to_ptr.vmem [resolvable:$true] %s31
      %37 = dma.hbm_to_vmem [thread:$0]  %s1, 2048, %s32, [#allocation6], 256, 256, 16
    $region9: #{tpu_custom_call.1} parent=1 // pred_fallthru
      _
    // Predicated region
    $region10: #{tpu_custom_call.1} parent=1 // pred_check
      _
    $region11: #{tpu_custom_call.1} parent=1 // pred_check_branch
      %39 = sbr.rel (0) target = $region13
    $region12: #{tpu_custom_call.1} parent=1 // pred_region
      _
    $region13: #{tpu_custom_call.1} parent=1 // pred_fallthru
      _
    // Predicated region
    $region14: #{tpu_custom_call.1} parent=1 // pred_check
      _
    $region15: #{tpu_custom_call.1} parent=1 // pred_check_branch
      %41 = sbr.rel (0) target = $region17
    $region16: #{tpu_custom_call.1} parent=1 // pred_region
      _
    $region17: #{tpu_custom_call.1} parent=1 // pred_fallthru
      _
    // Predicated region
    $region18: #{tpu_custom_call.1} parent=1 // pred_check
      _
    $region19: #{tpu_custom_call.1} parent=1 // pred_check_branch
      %43 = sbr.rel (0) target = $region21
    $region20: #{tpu_custom_call.1} parent=1 // pred_region
      _
    $region21: #{tpu_custom_call.1} parent=1 // pred_fallthru
      _
    // Predicated region
    $region22: #{tpu_custom_call.1} parent=1 // pred_check
      _
    $region23: #{tpu_custom_call.1} parent=1 // pred_check_branch
      %45 = sbr.rel (0) target = $region25
    $region24: #{tpu_custom_call.1} parent=1 // pred_region
      _
    $region25: #{tpu_custom_call.1} parent=1 // pred_fallthru
      _
    // Predicated region
    $region26: #{tpu_custom_call.1} parent=1 // pred_check
      _
    $region27: #{tpu_custom_call.1} parent=1 // pred_check_branch
      %47 = sbr.rel (0) target = $region29
    $region28: #{tpu_custom_call.1} parent=1 // pred_region
      %48 = dma.done [#allocation3], 2048
    $region29: #{tpu_custom_call.1} parent=1 // pred_fallthru
      _
    // Predicated region
    $region30: #{tpu_custom_call.1} parent=1 // pred_check
      _
    $region31: #{tpu_custom_call.1} parent=1 // pred_check_branch
      %50 = sbr.rel (0) target = $region33
    $region32: #{tpu_custom_call.1} parent=1 // pred_region
      %51 = dma.done [#allocation6], 2048
    $region33: #{tpu_custom_call.1} parent=1 // pred_fallthru
      _
    %v52 = vld [vmem:[#allocation2] sm:$0xff]
    %v53 = vld [vmem:[#allocation2 + $0x8] sm:$0xff]
    %v54 = vld [vmem:[#allocation2 + $0x10] sm:$0xff]
    %v55 = vld [vmem:[#allocation2 + $0x18] sm:$0xff]
    %v56 = vld [vmem:[#allocation2 + $0x20] sm:$0xff]
    %v57 = vld [vmem:[#allocation2 + $0x28] sm:$0xff]
    %v58 = vld [vmem:[#allocation2 + $0x30] sm:$0xff]
    %v59 = vld [vmem:[#allocation2 + $0x38] sm:$0xff]
    %v60 = vld [vmem:[#allocation2 + $0x40] sm:$0xff]
    %v61 = vld [vmem:[#allocation2 + $0x48] sm:$0xff]
    %v62 = vld [vmem:[#allocation2 + $0x50] sm:$0xff]
    %v63 = vld [vmem:[#allocation2 + $0x58] sm:$0xff]
    %v64 = vld [vmem:[#allocation2 + $0x60] sm:$0xff]
    %v65 = vld [vmem:[#allocation2 + $0x68] sm:$0xff]
    %v66 = vld [vmem:[#allocation2 + $0x70] sm:$0xff]
    %v67 = vld [vmem:[#allocation2 + $0x78] sm:$0xff]
    %v68 = vld [vmem:[#allocation5] sm:$0xff]
    %v69 = vld [vmem:[#allocation5 + $0x8] sm:$0xff]
    %v70 = vld [vmem:[#allocation5 + $0x10] sm:$0xff]
    %v71 = vld [vmem:[#allocation5 + $0x18] sm:$0xff]
    %v72 = vld [vmem:[#allocation5 + $0x20] sm:$0xff]
    %v73 = vld [vmem:[#allocation5 + $0x28] sm:$0xff]
    %v74 = vld [vmem:[#allocation5 + $0x30] sm:$0xff]
    %v75 = vld [vmem:[#allocation5 + $0x38] sm:$0xff]
    %v76 = vld [vmem:[#allocation5 + $0x40] sm:$0xff]
    %v77 = vld [vmem:[#allocation5 + $0x48] sm:$0xff]
    %v78 = vld [vmem:[#allocation5 + $0x50] sm:$0xff]
    %v79 = vld [vmem:[#allocation5 + $0x58] sm:$0xff]
    %v80 = vld [vmem:[#allocation5 + $0x60] sm:$0xff]
    %v81 = vld [vmem:[#allocation5 + $0x68] sm:$0xff]
    %v82 = vld [vmem:[#allocation5 + $0x70] sm:$0xff]
    %v83 = vld [vmem:[#allocation5 + $0x78] sm:$0xff]
    %v84 = vadd.f32 %v52, %v53
    %85 = vadd.xlane.f32.xlu0 %v84
    %v86 = vpop.xlane.xlu0 %85
    %v87 = vadd.f32 %v54, %v55
    %88 = vadd.xlane.f32.xlu0 %v87
    %v89 = vpop.xlane.xlu0 %88
    %v90 = vadd.f32 %v56, %v57
    %91 = vadd.xlane.f32.xlu0 %v90
    %v92 = vpop.xlane.xlu0 %91
    %v93 = vadd.f32 %v58, %v59
    %94 = vadd.xlane.f32.xlu0 %v93
    %v95 = vpop.xlane.xlu0 %94
    %v96 = vadd.f32 %v60, %v61
    %97 = vadd.xlane.f32.xlu0 %v96
    %v98 = vpop.xlane.xlu0 %97
    %v99 = vadd.f32 %v62, %v63
    %100 = vadd.xlane.f32.xlu0 %v99
    %v101 = vpop.xlane.xlu0 %100
    %v102 = vadd.f32 %v64, %v65
    %103 = vadd.xlane.f32.xlu0 %v102
    %v104 = vpop.xlane.xlu0 %103
    %v105 = vadd.f32 %v66, %v67
    %106 = vadd.xlane.f32.xlu0 %v105
    %v107 = vpop.xlane.xlu0 %106
    %v108 = vmul.f32 %v86, 0.00390625
    %v109 = vmul.f32 %v89, 0.00390625
    %v110 = vmul.f32 %v92, 0.00390625
    %v111 = vmul.f32 %v95, 0.00390625
    %v112 = vmul.f32 %v98, 0.00390625
    %v113 = vmul.f32 %v101, 0.00390625
    %v114 = vmul.f32 %v104, 0.00390625
    %v115 = vmul.f32 %v107, 0.00390625
    %v116 = vmax.f32 %v52, %v53
    %117 = vmax.xlane.f32.xlu0 %v116
    %v118 = vpop.xlane.xlu0 %117
    %v119 = vmax.f32 %v54, %v55
    %120 = vmax.xlane.f32.xlu0 %v119
    %v121 = vpop.xlane.xlu0 %120
    %v122 = vmax.f32 %v56, %v57
    %123 = vmax.xlane.f32.xlu0 %v122
    %v124 = vpop.xlane.xlu0 %123
    %v125 = vmax.f32 %v58, %v59
    %126 = vmax.xlane.f32.xlu0 %v125
    %v127 = vpop.xlane.xlu0 %126
    %v128 = vmax.f32 %v60, %v61
    %129 = vmax.xlane.f32.xlu0 %v128
    %v130 = vpop.xlane.xlu0 %129
    %v131 = vmax.f32 %v62, %v63
    %132 = vmax.xlane.f32.xlu0 %v131
    %v133 = vpop.xlane.xlu0 %132
    %v134 = vmax.f32 %v64, %v65
    %135 = vmax.xlane.f32.xlu0 %v134
    %v136 = vpop.xlane.xlu0 %135
    %v137 = vmax.f32 %v66, %v67
    %138 = vmax.xlane.f32.xlu0 %v137
    %v139 = vpop.xlane.xlu0 %138
    %v148 = vlaneseq
    %v149 = vand.u32 %v148, 127
    %v150 = vlaneseq
    %v151 = vshrl.u32 %v150, 7
    %v152 = vsub.s32 %v149, %v151
    %v153 = vrot.slane %v108, %v152
    %v154 = vadd.s32 %v149, 4294967288
    %v155 = vlaneseq
    %v156 = vshrl.u32 %v155, 7
    %v157 = vsub.s32 %v154, %v156
    %v158 = vrot.slane %v109, %v157
    %vm159 = vcmask 130112
    %v160 = vsel %vm159, %v158, %v153
    %v161 = vadd.s32 %v149, 4294967280
    %v162 = vlaneseq
    %v163 = vshrl.u32 %v162, 7
    %v164 = vsub.s32 %v161, %v163
    %v165 = vrot.slane %v110, %v164
    %vm166 = vcmask 195712
    %v167 = vsel %vm166, %v165, %v160
    %v168 = vadd.s32 %v149, 4294967272
    %v169 = vlaneseq
    %v170 = vshrl.u32 %v169, 7
    %v171 = vsub.s32 %v168, %v170
    %v172 = vrot.slane %v111, %v171
    %vm173 = vcmask 261312
    %v174 = vsel %vm173, %v172, %v167
    %v175 = vlaneseq
    %v176 = vshrl.u32 %v175, 7
    %v177 = vsub.s32 %v149, %v176
    %v178 = vrot.slane %v112, %v177
    %v179 = vlaneseq
    %v180 = vshrl.u32 %v179, 7
    %v181 = vsub.s32 %v154, %v180
    %v182 = vrot.slane %v113, %v181
    %v183 = vsel %vm159, %v182, %v178
    %v184 = vlaneseq
    %v185 = vshrl.u32 %v184, 7
    %v186 = vsub.s32 %v161, %v185
    %v187 = vrot.slane %v114, %v186
    %v188 = vsel %vm166, %v187, %v183
    %v189 = vlaneseq
    %v190 = vshrl.u32 %v189, 7
    %v191 = vsub.s32 %v168, %v190
    %v192 = vrot.slane %v115, %v191
    %v193 = vsel %vm173, %v192, %v188
    %vm194 = vcmask 1041409
    %v195 = vsel %vm194, %v193, %v174
    %v205 = vlaneseq
    %v206 = vshrl.u32 %v205, 7
    %v207 = vsub.s32 %v149, %v206
    %v208 = vrot.slane %v118, %v207
    %v209 = vlaneseq
    %v210 = vshrl.u32 %v209, 7
    %v211 = vsub.s32 %v154, %v210
    %v212 = vrot.slane %v121, %v211
    %v213 = vsel %vm159, %v212, %v208
    %v214 = vlaneseq
    %v215 = vshrl.u32 %v214, 7
    %v216 = vsub.s32 %v161, %v215
    %v217 = vrot.slane %v124, %v216
    %v218 = vsel %vm166, %v217, %v213
    %v219 = vlaneseq
    %v220 = vshrl.u32 %v219, 7
    %v221 = vsub.s32 %v168, %v220
    %v222 = vrot.slane %v127, %v221
    %v223 = vsel %vm173, %v222, %v218
    %v224 = vlaneseq
    %v225 = vshrl.u32 %v224, 7
    %v226 = vsub.s32 %v149, %v225
    %v227 = vrot.slane %v130, %v226
    %v228 = vlaneseq
    %v229 = vshrl.u32 %v228, 7
    %v230 = vsub.s32 %v154, %v229
    %v231 = vrot.slane %v133, %v230
    %v232 = vsel %vm159, %v231, %v227
    %v233 = vlaneseq
    %v234 = vshrl.u32 %v233, 7
    %v235 = vsub.s32 %v161, %v234
    %v236 = vrot.slane %v136, %v235
    %v237 = vsel %vm166, %v236, %v232
    %v238 = vlaneseq
    %v239 = vshrl.u32 %v238, 7
    %v240 = vsub.s32 %v168, %v239
    %v241 = vrot.slane %v139, %v240
    %v242 = vsel %vm173, %v241, %v237
    %vm243 = vcmask 1043459
    %v244 = vsel %vm243, %v242, %v223
    %vm246 = vcmask 1041408
    %v247 = vsel %vm246, %v195, %v244
    %v248 = vld [vmem:[%s2] sm:$0xff]
    %v249 = vld [vmem:[%s2 + $0x8] sm:$0xff]
    %v250 = vld [vmem:[%s2 + $0x10] sm:$0xff]
    %v251 = vld [vmem:[%s2 + $0x18] sm:$0xff]
    %v252 = vld [vmem:[%s3] sm:$0x1]
    %v253 = vld [vmem:[%s4] sm:$0x3]
    %v254 = vld [vmem:[%s5] sm:$0x1]
    %v256 = vlaneseq
    %v257 = vshrl.u32 %v256, 7
    %v258 = vsub.s32 0, %v257
    %v259 = vrot.slane %v252, %v258
    %vm261 = vcmask 261120
    %v263 = vsel %vm261, %v247, 0
    %265 = vmatprep.subr.mxu0 0.0
    %266 = vmatpush1.msra.mxu0 %v248
    %267 = vmatprep.subr.mxu0 0.0
    %268 = vmatpush1.msra.mxu0 %v249
    %269 = vmatprep.subr.mxu0 0.0
    %270 = vmatpush1.msra.mxu0 %v250
    %271 = vmatprep.subr.mxu0 0.0
    %272 = vmatpush1.msra.mxu0 %v251
    %273 = vmatprep.subr.mxu0 0.0
    %274 = vmatpush1.msra.mxu0 0.0
    %275 = vmatprep.subr.mxu0 0.0
    %276 = vmatpush1.msra.mxu0 0.0
    %277 = vmatprep.subr.mxu0 0.0
    %278 = vmatpush1.msra.mxu0 0.0
    %279 = vmatprep.subr.mxu0 0.0
    %280 = vmatpush1.msra.mxu0 0.0
    %281 = vmatprep.subr.mxu0 0.0
    %282 = vmatpush1.msra.mxu0 0.0
    %283 = vmatprep.subr.mxu0 0.0
    %284 = vmatpush1.msra.mxu0 0.0
    %285 = vmatprep.subr.mxu0 0.0
    %286 = vmatpush1.msra.mxu0 0.0
    %287 = vmatprep.subr.mxu0 0.0
    %288 = vmatpush1.msra.mxu0 0.0
    %289 = vmatprep.subr.mxu0 0.0
    %290 = vmatpush1.msra.mxu0 0.0
    %291 = vmatprep.subr.mxu0 0.0
    %292 = vmatpush1.msra.mxu0 0.0
    %293 = vmatprep.subr.mxu0 0.0
    %294 = vmatpush1.msra.mxu0 0.0
    %295 = vmatprep.subr.mxu0 0.0
    %296 = vmatpush1.msra.mxu0 0.0
    %297 = vmatprep.subr.mxu0 0.0
    %298 = vmatpush1.msra.mxu0 0.0
    %299 = vmatprep.subr.mxu0 0.0
    %300 = vmatpush1.msra.mxu0 0.0
    %301 = vmatprep.subr.mxu0 0.0
    %302 = vmatpush1.msra.mxu0 0.0
    %303 = vmatprep.subr.mxu0 0.0
    %304 = vmatpush1.msra.mxu0 0.0
    %305 = vmatprep.subr.mxu0 0.0
    %306 = vmatpush1.msra.mxu0 0.0
    %307 = vmatprep.subr.mxu0 0.0
    %308 = vmatpush1.msra.mxu0 0.0
    %309 = vmatprep.subr.mxu0 0.0
    %310 = vmatpush1.msra.mxu0 0.0
    %311 = vmatprep.subr.mxu0 0.0
    %312 = vmatpush1.msra.mxu0 0.0
    %313 = vmatprep.subr.mxu0 0.0
    %314 = vmatpush1.msra.mxu0 0.0
    %315 = vmatprep.subr.mxu0 0.0
    %316 = vmatpush1.msra.mxu0 0.0
    %317 = vmatprep.subr.mxu0 0.0
    %318 = vmatpush1.msra.mxu0 0.0
    %319 = vmatprep.subr.mxu0 0.0
    %320 = vmatpush1.msra.mxu0 0.0
    %321 = vmatprep.subr.mxu0 0.0
    %322 = vmatpush1.msra.mxu0 0.0
    %323 = vmatprep.subr.mxu0 0.0
    %324 = vmatpush1.msra.mxu0 0.0
    %325 = vmatprep.subr.mxu0 0.0
    %326 = vmatpush1.msra.mxu0 0.0
    %327 = vmatprep.subr.mxu0 0.0
    %328 = vmatpush1.msra.mxu0 0.0
    %329 = vmatprep.mubr.f32.mxu0 0.0
    %330 = vmatmul.mubr.f32.gmra.mrb[0].mxu0 %v263
    %v331 = vpop.f32.mrb[0].mxu0
    %v332 = vadd.f32 %v259, %v331
    %v333 = vpop.f32.mrb[0].mxu0
    %334 = vdwg.mxu0
    %v335 = vmax.f32 %v332, 0.0
    %337 = vset.pattern.permute.xlu0 0
    %338 = vperm.xlu0 %337, %v335
    %v339 = vpop.permute.xlu0 %338
    %v341 = vlaneseq
    %v342 = vshrl.u32 %v341, 7
    %v343 = vsub.s32 0, %v342
    %v344 = vrot.slane %v253, %v343
    %v345 = vmul.f32 %v339, %v344
    %346 = vset.pattern.permute.xlu0 1
    %347 = vperm.xlu0 %346, %v335
    %v348 = vpop.permute.xlu0 %347
    %v350 = vlaneseq
    %v351 = vshrl.u32 %v350, 7
    %v352 = vsub.s32 1, %v351
    %v353 = vrot.slane %v253, %v352
    %v354 = vmul.f32 %v348, %v353
    %v355 = vadd.f32 %v345, %v354
    %v357 = vlaneseq
    %v358 = vshrl.u32 %v357, 7
    %v359 = vsub.s32 0, %v358
    %v360 = vrot.slane %v254, %v359
    %v362 = vadd.f32 %v355, %v360
    %v364 = vrot.slane %v362, 2
    %v366 = vadd.f32 %v362, %v364
    %v367 = vxor.u32 %v366, 2147483648
    %v368 = vmul.f32 %v367, 1.442695
    %v369 = vpow.pop %v368
    %v370 = vadd.f32 %v369, 1.0
    %v371 = vrcp.pop %v370
    %v372 = vmul.f32 1.0, %v371
    %v373 = vlaneseq
    %v374 = vshrl.u32 %v373, 7
    %v375 = vsub.s32 0, %v374
    %v376 = vrot.slane %v372, %v375
    %378 = vbcast.lane.b32.xlu0 %v376, 256
    %v379 = vpop.permute.xlu0 %378
    %s381 = sor.u32 256, 8
    %382 = vbcast.lane.b32.xlu0 %v376, %s381
    %v383 = vpop.permute.xlu0 %382
    %s385 = sor.u32 256, 16
    %386 = vbcast.lane.b32.xlu0 %v376, %s385
    %v387 = vpop.permute.xlu0 %386
    %s389 = sor.u32 256, 24
    %390 = vbcast.lane.b32.xlu0 %v376, %s389
    %v391 = vpop.permute.xlu0 %390
    %v392 = vlaneseq
    %v393 = vshrl.u32 %v392, 7
    %v394 = vsub.s32 1, %v393
    %v395 = vrot.slane %v372, %v394
    %397 = vbcast.lane.b32.xlu0 %v395, 256
    %v398 = vpop.permute.xlu0 %397
    %s400 = sor.u32 256, 8
    %401 = vbcast.lane.b32.xlu0 %v395, %s400
    %v402 = vpop.permute.xlu0 %401
    %s404 = sor.u32 256, 16
    %405 = vbcast.lane.b32.xlu0 %v395, %s404
    %v406 = vpop.permute.xlu0 %405
    %s408 = sor.u32 256, 24
    %409 = vbcast.lane.b32.xlu0 %v395, %s408
    %v410 = vpop.permute.xlu0 %409
    %v411 = vsub.f32 %v52, %v68
    %v412 = vsub.f32 %v53, %v69
    %v413 = vsub.f32 %v54, %v70
    %v414 = vsub.f32 %v55, %v71
    %v415 = vsub.f32 %v56, %v72
    %v416 = vsub.f32 %v57, %v73
    %v417 = vsub.f32 %v58, %v74
    %v418 = vsub.f32 %v59, %v75
    %v419 = vsub.f32 %v60, %v76
    %v420 = vsub.f32 %v61, %v77
    %v421 = vsub.f32 %v62, %v78
    %v422 = vsub.f32 %v63, %v79
    %v423 = vsub.f32 %v64, %v80
    %v424 = vsub.f32 %v65, %v81
    %v425 = vsub.f32 %v66, %v82
    %v426 = vsub.f32 %v67, %v83
    %v427 = vmul.f32 %v379, %v411
    %v428 = vmul.f32 %v379, %v412
    %v429 = vmul.f32 %v383, %v413
    %v430 = vmul.f32 %v383, %v414
    %v431 = vmul.f32 %v387, %v415
    %v432 = vmul.f32 %v387, %v416
    %v433 = vmul.f32 %v391, %v417
    %v434 = vmul.f32 %v391, %v418
    %v435 = vmul.f32 %v398, %v419
    %v436 = vmul.f32 %v398, %v420
    %v437 = vmul.f32 %v402, %v421
    %v438 = vmul.f32 %v402, %v422
    %v439 = vmul.f32 %v406, %v423
    %v440 = vmul.f32 %v406, %v424
    %v441 = vmul.f32 %v410, %v425
    %v442 = vmul.f32 %v410, %v426
    %v443 = vadd.f32 %v68, %v427
    %v444 = vadd.f32 %v69, %v428
    %v445 = vadd.f32 %v70, %v429
    %v446 = vadd.f32 %v71, %v430
    %v447 = vadd.f32 %v72, %v431
    %v448 = vadd.f32 %v73, %v432
    %v449 = vadd.f32 %v74, %v433
    %v450 = vadd.f32 %v75, %v434
    %v451 = vadd.f32 %v76, %v435
    %v452 = vadd.f32 %v77, %v436
    %v453 = vadd.f32 %v78, %v437
    %v454 = vadd.f32 %v79, %v438
    %v455 = vadd.f32 %v80, %v439
    %v456 = vadd.f32 %v81, %v440
    %v457 = vadd.f32 %v82, %v441
    %v458 = vadd.f32 %v83, %v442
    %459 = vst [vmem:[#allocation7] sm:$0xff] %v443
    %460 = vst [vmem:[#allocation7 + $0x8] sm:$0xff] %v444
    %461 = vst [vmem:[#allocation7 + $0x10] sm:$0xff] %v445
    %462 = vst [vmem:[#allocation7 + $0x18] sm:$0xff] %v446
    %463 = vst [vmem:[#allocation7 + $0x20] sm:$0xff] %v447
    %464 = vst [vmem:[#allocation7 + $0x28] sm:$0xff] %v448
    %465 = vst [vmem:[#allocation7 + $0x30] sm:$0xff] %v449
    %466 = vst [vmem:[#allocation7 + $0x38] sm:$0xff] %v450
    %467 = vst [vmem:[#allocation7 + $0x40] sm:$0xff] %v451
    %468 = vst [vmem:[#allocation7 + $0x48] sm:$0xff] %v452
    %469 = vst [vmem:[#allocation7 + $0x50] sm:$0xff] %v453
    %470 = vst [vmem:[#allocation7 + $0x58] sm:$0xff] %v454
    %471 = vst [vmem:[#allocation7 + $0x60] sm:$0xff] %v455
    %472 = vst [vmem:[#allocation7 + $0x68] sm:$0xff] %v456
    %473 = vst [vmem:[#allocation7 + $0x70] sm:$0xff] %v457
    %474 = vst [vmem:[#allocation7 + $0x78] sm:$0xff] %v458
    // Predicated region
    $region34: #{tpu_custom_call.1} parent=1 // pred_check
      _
    $region35: #{tpu_custom_call.1} parent=1 // pred_check_branch
      %476 = sbr.rel (0) target = $region37
    $region36: #{tpu_custom_call.1} parent=1 // pred_region
      %s478 = ssub.s32 2048, 2048
      %479 = vsyncadd [#allocation4], %s478
      %s480 = sshll.u32 [#allocation7], 4
      %s481 = int_to_ptr.vmem [resolvable:$true] %s480
      %486 = dma.vmem_to_hbm [thread:$0]  %s481, 2048, %s6, [#allocation4], 256, 256, 16
    $region37: #{tpu_custom_call.1} parent=1 // pred_fallthru
      _
    // Predicated region
    $region38: #{tpu_custom_call.1} parent=1 // pred_check
      _
    $region39: #{tpu_custom_call.1} parent=1 // pred_check_branch
      %488 = sbr.rel (0) target = $region41
    $region40: #{tpu_custom_call.1} parent=1 // pred_region
      %489 = dma.done [#allocation4], 2048
    $region41: #{tpu_custom_call.1} parent=1 // pred_fallthru
      _
    %490 = vsyncpa [#allocation3], 1
    %491 = vsyncpa [#allocation6], 1
    %492 = vsyncpa [#allocation4], 1

</llo_original>
